<compile_context>
chip_gen: v6e
topology: v6e:2x2x1
jax: 0.10.0
libtpu: 0.0.40
codegen_flags: <defaults>
</compile_context>

<pallas_src>
import re

import jax
import jax.numpy as jnp
from jax.experimental import pallas as pl
from jax.experimental.pallas import tpu as pltpu


MIN_BETA = 0.01
INIT_BETA = 1.0


def _sdf_to_density_kernel(beta_ref, sdf_ref, out_ref):
    # Scalar prologue (scalar unit): beta, alpha, -1/beta, alpha/2 computed once.
    beta = MIN_BETA + jnp.abs(beta_ref[0, 0])
    alpha = 1.0 / beta
    neg_inv_beta = -alpha
    half_alpha = 0.5 * alpha

    # Vector body: abs + 2 muls + sub + cmp + select (VPU), exp (EUP).
    # No vector divide; alpha is folded into the select operands.
    x = sdf_ref[...].astype(jnp.float32)
    t = half_alpha * jnp.exp(jnp.abs(x) * neg_inv_beta)   # alpha*0.5*e^{-|x|/beta}
    # x >= 0: alpha * 0.5 * e^{-x/beta}            (= t)
    # x <  0: alpha * (1 - 0.5 * e^{-|x|/beta})    (= alpha - t)
    # x == 0: alpha * 0.5  (matches sign(0) == 0 in the reference)
    dens = jnp.where(x >= 0.0, t, alpha - t)
    out_ref[...] = dens.astype(out_ref.dtype)


def _round_up(x, m):
    return -(-x // m) * m


def _tpu_generation():
    """Best-effort TPU generation number from device_kind (e.g. 'TPU v6e' -> 6)."""
    try:
        kind = jax.devices()[0].device_kind
    except Exception:
        return 6
    m = re.search(r"(\d+)", kind)
    return int(m.group(1)) if m else 6


def _gen_params(gen):
    """(target_block_bytes, vmem_limit_bytes_or_None, want_multi_step)."""
    if gen >= 7:
        # ~3.2 TB/s HBM: 8 MiB blocks keep the 0.35 us/step overhead <10%.
        # 4 double-buffered copies x 8 MiB = 32 MiB -> raise scoped VMEM to 48 MiB.
        return 8 << 20, 48 << 20, True
    if gen == 6:
        # ~1.4 TB/s: ~4 MiB is the measured knee (85-86% of roofline).
        return 4 << 20, 48 << 20, False
    # v5e and older: ~0.82 TB/s, 2 MiB blocks already hide step overhead and
    # 4 x 2 MiB fits the 16 MiB default scoped VMEM without any flag.
    return 2 << 20, None, False


def _choose_lanes(n):
    """Widest of {512, 256, 128} lanes that divides n (else 128 + tiny pad)."""
    for lanes in (512, 256, 128):
        if n >= lanes and n % lanes == 0:
            return lanes
    return 128


def _plan_rows(padded, lanes, itemsize, block_bytes, want_multi_step):
    """Pick (rows, tile_rows) for the (rows, lanes) slab."""
    sub = 16 if itemsize == 2 else 8                    # sublane granularity
    rows = padded // lanes
    target_rows = max(sub, block_bytes // (lanes * itemsize))
    target_rows = (target_rows // sub) * sub            # multiple of sublanes
    tile_rows = min(target_rows, _round_up(rows, sub))
    if want_multi_step and tile_rows >= rows and rows > sub:
        # v7x megacore: never collapse to a single grid step -- split in two so
        # both TensorCores (and their DMA engines) get work.
        tile_rows = _round_up(pl.cdiv(rows, 2), sub)
    return rows, tile_rows


def sdf_to_density(sdf, beta_param, *, donate=False):
    """Applies the SDFToDensity transform elementwise via a Pallas TPU kernel.

    sdf: any-shape float array (e.g. NCHW [B, C, H, W]).
    beta_param: scalar (shape () or (1,)) learnable beta parameter.
    donate: if True, alias the slab input to the output (use inside jitted
            models where the input buffer is dead after this call).
    """
    orig_shape = sdf.shape
    orig_dtype = sdf.dtype

    # Keep f32 / bf16 in HBM as-is; route f16 through bf16 (not f32) to halve
    # kernel traffic; anything else falls back to f32.
    if orig_dtype in (jnp.dtype(jnp.float32), jnp.dtype(jnp.bfloat16)):
        slab_dtype = orig_dtype
    elif orig_dtype == jnp.dtype(jnp.float16):
        slab_dtype = jnp.dtype(jnp.bfloat16)
    else:
        slab_dtype = jnp.dtype(jnp.float32)

    flat = sdf.reshape(-1)
    if flat.dtype != slab_dtype:
        flat = flat.astype(slab_dtype)
    n = flat.shape[0]
    itemsize = jnp.dtype(slab_dtype).itemsize

    gen = _tpu_generation()
    block_bytes, vmem_limit, want_multi_step = _gen_params(gen)

    lanes = _choose_lanes(n)
    padded = _round_up(n, lanes)
    needs_pad = padded != n
    if needs_pad:
        # Only for lane-ragged sizes (pad < 128 elements of payload); the
        # common 128/256/512-divisible case never takes this branch.
        flat = jnp.pad(flat, (0, padded - n))
    rows, tile_rows = _plan_rows(padded, lanes, itemsize, block_bytes,
                                 want_multi_step)
    slab = flat.reshape(rows, lanes)           # reshape of contiguous data: free

    beta2d = jnp.asarray(beta_param, dtype=jnp.float32).reshape(1, 1)

    # Final partial row-block (rows % tile_rows != 0) is masked by Pallas; the
    # block shape itself stays (multiple of sublanes, multiple of 128 lanes).
    grid = (pl.cdiv(rows, tile_rows),)

    compiler_kwargs = dict(dimension_semantics=("parallel",))
    if vmem_limit is not None:
        compiler_kwargs["vmem_limit_bytes"] = vmem_limit

    pallas_kwargs = {}
    if donate:
        pallas_kwargs["input_output_aliases"] = {1: 0}   # slab -> output

    out = pl.pallas_call(
        _sdf_to_density_kernel,
        out_shape=jax.ShapeDtypeStruct((rows, lanes), slab_dtype),
        grid_spec=pl.GridSpec(
            grid=grid,
            in_specs=[
                # scalar beta parameter in SMEM (whole (1,1) array every step)
                pl.BlockSpec((1, 1), lambda i: (0, 0),
                             memory_space=pltpu.MemorySpace.SMEM),
                # sdf slab, large lane-dense tiles along rows
                pl.BlockSpec((tile_rows, lanes), lambda i: (i, 0)),
            ],
            out_specs=pl.BlockSpec((tile_rows, lanes), lambda i: (i, 0)),
        ),
        compiler_params=pltpu.CompilerParams(**compiler_kwargs),
        cost_estimate=pl.CostEstimate(
            flops=6 * n, transcendentals=n, bytes_accessed=2 * n * itemsize),
        **pallas_kwargs,
    )(beta2d, slab)

    out = out.reshape(-1)
    if needs_pad:
        out = out[:n]
    out = out.reshape(orig_shape)
    if out.dtype != orig_dtype:
        out = out.astype(orig_dtype)
    return out


def sdf_to_density_ref(sdf, beta_param):
    """Pure-JAX reference matching the PyTorch module exactly (f32 math)."""
    x = sdf.astype(jnp.float32)
    beta = MIN_BETA + jnp.abs(jnp.asarray(beta_param, jnp.float32)).reshape(())
    alpha = 1.0 / beta
    return alpha * (0.5 + 0.5 * jnp.sign(x) * jnp.expm1(-jnp.abs(x) / beta))


if __name__ == "__main__":
    key = jax.random.PRNGKey(0)
    k1, k2, k3 = jax.random.split(key, 3)

    beta_param = jnp.array([INIT_BETA], dtype=jnp.float32)

    # 1) Small NCHW SDF field (512-lane aligned: no pad / no slice).
    x = jax.random.normal(k1, (2, 4, 16, 16), dtype=jnp.float32) * 0.5
    out = jax.block_until_ready(sdf_to_density(x, beta_param))
    ref = sdf_to_density_ref(x, beta_param)
    assert out.shape == x.shape and out.dtype == x.dtype
    assert jnp.allclose(out, ref, atol=1e-5, rtol=1e-5), "f32 aligned mismatch"

    # 2) Larger spatial field exercising the wide-lane layout + multi-step grid.
    x2 = jax.random.normal(k2, (2, 4, 64, 64), dtype=jnp.float32) * 0.5
    out2 = jax.block_until_ready(sdf_to_density(x2, beta_param))
    ref2 = sdf_to_density_ref(x2, beta_param)
    assert jnp.allclose(out2, ref2, atol=1e-5, rtol=1e-5), "f32 wide mismatch"

    # 3) Ragged shape exercising the lane-pad + masked-tail path.
    x3 = jax.random.normal(k3, (3, 5, 7, 11), dtype=jnp.float32) * 0.5
    out3 = jax.block_until_ready(sdf_to_density(x3, beta_param))
    ref3 = sdf_to_density_ref(x3, beta_param)
    assert jnp.allclose(out3, ref3, atol=1e-5, rtol=1e-5), "f32 ragged mismatch"

    # 4) bf16 input kept bf16 in HBM, f32 compute in-kernel.
    xb = (jax.random.normal(k1, (2, 4, 16, 16), dtype=jnp.float32) * 0.5
          ).astype(jnp.bfloat16)
    outb = jax.block_until_ready(sdf_to_density(xb, beta_param))
    refb = sdf_to_density_ref(xb, beta_param)
    assert outb.shape == xb.shape and outb.dtype == xb.dtype
    assert jnp.allclose(outb.astype(jnp.float32), refb, atol=2e-2, rtol=2e-2), \
        "bf16 mismatch"

    print("KERNEL_OK")
</pallas_src>

<mosaic_0001>
module attributes {stable_mosaic.version = 11 : i64} {
  func.func @_sdf_to_density_kernel(%arg0: i32, %arg1: memref<1x1xf32, #tpu.memory_space<smem>>, %arg2: memref<8x512xf32, #tpu.memory_space<vmem>>, %arg3: memref<8x512xf32, #tpu.memory_space<vmem>>) attributes {dimension_semantics = [#tpu.dimension_semantics<parallel>], iteration_bounds = array<i64: 1>, scalar_prefetch = 0 : i64, scratch_operands = 0 : i64, tpu.core_type = #tpu.core_type<tc>, window_params = [{transform_indices = @transform_0, window_bounds = array<i64: 1, 1>}, {transform_indices = @transform_1, window_bounds = array<i64: 8, 512>}, {transform_indices = @transform_2, window_bounds = array<i64: 8, 512>}]} {
    %c0 = arith.constant 0 : index
    %c0_0 = arith.constant 0 : index
    %0 = memref.load %arg1[%c0, %c0_0] : memref<1x1xf32, #tpu.memory_space<smem>>
    %1 = math.absf %0 : f32
    %cst = arith.constant 0.00999999977 : f32
    %2 = arith.addf %cst, %1 : f32
    %cst_1 = arith.constant 1.000000e+00 : f32
    %3 = arith.divf %cst_1, %2 : f32
    %cst_2 = arith.constant 0.000000e+00 : f32
    %4 = arith.subf %cst_2, %3 : f32
    %cst_3 = arith.constant 5.000000e-01 : f32
    %5 = arith.mulf %cst_3, %3 : f32
    %c0_4 = arith.constant 0 : index
    %c0_5 = arith.constant 0 : index
    %6 = vector.load %arg2[%c0_4, %c0_5] : memref<8x512xf32, #tpu.memory_space<vmem>>, vector<8x512xf32>
    %7 = math.absf %6 : vector<8x512xf32>
    %8 = vector.broadcast %4 : f32 to vector<8x512xf32>
    %9 = arith.mulf %7, %8 : vector<8x512xf32>
    %10 = math.exp %9 : vector<8x512xf32>
    %11 = vector.broadcast %5 : f32 to vector<8x512xf32>
    %12 = arith.mulf %11, %10 : vector<8x512xf32>
    %cst_6 = arith.constant 0.000000e+00 : f32
    %13 = vector.broadcast %cst_6 : f32 to vector<8x512xf32>
    %14 = arith.cmpf oge, %6, %13 : vector<8x512xf32>
    %15 = vector.broadcast %3 : f32 to vector<8x512xf32>
    %16 = arith.subf %15, %12 : vector<8x512xf32>
    %17 = arith.select %14, %12, %16 : vector<8x512xi1>, vector<8x512xf32>
    %c0_7 = arith.constant 0 : index
    %c0_8 = arith.constant 0 : index
    %18 = vector.load %arg3[%c0_7, %c0_8] : memref<8x512xf32, #tpu.memory_space<vmem>>, vector<8x512xf32>
    tpu.vector_store %arg3[%c0_7, %c0_8], %17 {strides = array<i32>} : memref<8x512xf32, #tpu.memory_space<vmem>>, vector<8x512xf32>,
    return
  }
  func.func @transform_0(%arg0: i32) -> (i32, i32) {
    %c0_i32 = arith.constant 0 : i32
    %c0_i32_0 = arith.constant 0 : i32
    %c0_i32_1 = arith.constant 0 : i32
    return %c0_i32, %c0_i32_0 : i32, i32
  }
  func.func @transform_1(%arg0: i32) -> (i32, i32) {
    %c0_i32 = arith.constant 0 : i32
    %c0_i32_0 = arith.constant 0 : i32
    return %arg0, %c0_i32 : i32, i32
  }
  func.func @transform_2(%arg0: i32) -> (i32, i32) {
    %c0_i32 = arith.constant 0 : i32
    %c0_i32_0 = arith.constant 0 : i32
    return %arg0, %c0_i32 : i32, i32
  }
}

</mosaic_0001>

<llo_original>
// kernel: tpu_custom_call.1
$region0: #{tpu_custom_call.1}
  #allocation0 [shape = 'u32[]', space=smem, size = 0x4, offset = 0x4, fixed_abs, tag = 'smem constant byte address 0x4 - core index']
  #allocation1 [shape = 'u32[144,128]{1,0:T(1,128)}', space=vmem, size = 0x12000, scoped, tag = 'internal scratch']
  #allocation2 [shape = 'f32[1,1]{1,0:T(1,128)S(6)}', space=smem, size = 0x200, scoped, tag = 'scoped memory for tpu_custom_call.1']
  %s0 = inlined_call_operand.<no memory space> [shape: f32[1,1], index: 0, kind: input, shape index: {}]
  %s1 = inlined_call_operand.hbm [shape: f32[4,512], index: 1, kind: input, shape index: {}]
  %s2 = inlined_call_operand.hbm [shape: f32[4,512], index: 2, kind: output, shape index: {}]
  %s3 = sld [smem:[#allocation0]]
  $region22: #{tpu_custom_call.1} parent=0
    _
  %s5 = ssub.s32 1, %s3
  %s6 = scalar_select 0, %s5, %s3
  %7 = sst [smem:[#allocation2]] %s0
  $region1: #{tpu_custom_call.1} parent=0
    #allocation3 [shape = 'u8[16384]{0}', space=vmem, size = 0x4000, scoped, tag = 'input window, operand 1, single buffered']
    #allocation4 [shape = 's32[1]{0}', space=sflag, size = 0x4, scoped, tag = 'scoped memory for tpu_custom_call.1']
    #allocation5 [shape = 's32[1]{0}', space=sflag, size = 0x4, scoped, tag = 'scoped memory for tpu_custom_call.1']
    #allocation6 [shape = 'u8[16384]{0}', space=vmem, size = 0x4000, scoped, tag = 'output window, operand 0, single buffered']
    %8 = vsyncpa [#allocation4], 0
    %9 = vsyncpa [#allocation5], 0
    // Predicated region
    $region2: #{tpu_custom_call.1} parent=1 // pred_check
      _
    $region3: #{tpu_custom_call.1} parent=1 // pred_check_branch
      %11 = sbr.rel (0) target = $region5
    $region4: #{tpu_custom_call.1} parent=1 // pred_region
      _
    $region5: #{tpu_custom_call.1} parent=1 // pred_fallthru
      _
    // Predicated region
    $region6: #{tpu_custom_call.1} parent=1 // pred_check
      _
    $region7: #{tpu_custom_call.1} parent=1 // pred_check_branch
      %13 = sbr.rel (0) target = $region9
    $region8: #{tpu_custom_call.1} parent=1 // pred_region
      %s15 = ssub.s32 512, 256
      %16 = vsyncadd [#allocation4], %s15
      %s17 = sshll.u32 [#allocation3], 4
      %s18 = int_to_ptr.vmem [resolvable:$true] %s17
      %23 = dma.hbm_to_vmem [thread:$0]  %s1, 256, %s18, [#allocation4], 256, 256, 16
    $region9: #{tpu_custom_call.1} parent=1 // pred_fallthru
      _
    // Predicated region
    $region10: #{tpu_custom_call.1} parent=1 // pred_check
      _
    $region11: #{tpu_custom_call.1} parent=1 // pred_check_branch
      %25 = sbr.rel (0) target = $region13
    $region12: #{tpu_custom_call.1} parent=1 // pred_region
      %26 = dma.done [#allocation4], 512
    $region13: #{tpu_custom_call.1} parent=1 // pred_fallthru
      _
    %s27 = sld [smem:[#allocation2]]
    %s28 = sand.u32 2147483647, %s27
    %s29 = sadd.f32 %s28, 0.01
    %v30 = vstv %s29
    %v31 = vrcp.pop %v30
    %s32 = vtos %v31
    %s33 = ssub.f32 0.0, %s32
    %s34 = smul.f32 %s32, 0.5
    %v35 = vld [vmem:[#allocation3] sm:$0xff]
    %v36 = vld [vmem:[#allocation3 + $0x8] sm:$0xff]
    %v37 = vld [vmem:[#allocation3 + $0x10] sm:$0xff]
    %v38 = vld [vmem:[#allocation3 + $0x18] sm:$0xff]
    %v39 = vand.u32 2147483647, %v35
    %v40 = vand.u32 2147483647, %v36
    %v41 = vand.u32 2147483647, %v37
    %v42 = vand.u32 2147483647, %v38
    %v43 = vstv %s33
    %v44 = vmul.f32 %v39, %v43
    %v45 = vmul.f32 %v40, %v43
    %v46 = vmul.f32 %v41, %v43
    %v47 = vmul.f32 %v42, %v43
    %v48 = vmul.f32 %v44, 1.442695
    %v49 = vpow.pop %v48
    %v50 = vmul.f32 %v45, 1.442695
    %v51 = vpow.pop %v50
    %v52 = vmul.f32 %v46, 1.442695
    %v53 = vpow.pop %v52
    %v54 = vmul.f32 %v47, 1.442695
    %v55 = vpow.pop %v54
    %v56 = vstv %s34
    %v57 = vmul.f32 %v56, %v49
    %v58 = vmul.f32 %v56, %v51
    %v59 = vmul.f32 %v56, %v53
    %v60 = vmul.f32 %v56, %v55
    %vm61 = vcmp.ge.f32.partialorder %v35, 0.0
    %vm62 = vcmp.ge.f32.partialorder %v36, 0.0
    %vm63 = vcmp.ge.f32.partialorder %v37, 0.0
    %vm64 = vcmp.ge.f32.partialorder %v38, 0.0
    %v65 = vstv %s32
    %v66 = vsub.f32 %v65, %v57
    %v67 = vsub.f32 %v65, %v58
    %v68 = vsub.f32 %v65, %v59
    %v69 = vsub.f32 %v65, %v60
    %v70 = vsel %vm61, %v57, %v66
    %v71 = vsel %vm62, %v58, %v67
    %v72 = vsel %vm63, %v59, %v68
    %v73 = vsel %vm64, %v60, %v69
    %74 = vst [vmem:[#allocation6] sm:$0xff] %v70
    %75 = vst [vmem:[#allocation6 + $0x8] sm:$0xff] %v71
    %76 = vst [vmem:[#allocation6 + $0x10] sm:$0xff] %v72
    %77 = vst [vmem:[#allocation6 + $0x18] sm:$0xff] %v73
    // Predicated region
    $region14: #{tpu_custom_call.1} parent=1 // pred_check
      _
    $region15: #{tpu_custom_call.1} parent=1 // pred_check_branch
      %79 = sbr.rel (0) target = $region17
    $region16: #{tpu_custom_call.1} parent=1 // pred_region
      %s81 = ssub.s32 512, 256
      %82 = vsyncadd [#allocation5], %s81
      %s83 = sshll.u32 [#allocation6], 4
      %s84 = int_to_ptr.vmem [resolvable:$true] %s83
      %89 = dma.vmem_to_hbm [thread:$0]  %s84, 256, %s2, [#allocation5], 256, 256, 16
    $region17: #{tpu_custom_call.1} parent=1 // pred_fallthru
      _
    // Predicated region
    $region18: #{tpu_custom_call.1} parent=1 // pred_check
      _
    $region19: #{tpu_custom_call.1} parent=1 // pred_check_branch
      %91 = sbr.rel (0) target = $region21
    $region20: #{tpu_custom_call.1} parent=1 // pred_region
      %92 = dma.done [#allocation5], 512
    $region21: #{tpu_custom_call.1} parent=1 // pred_fallthru
      _
    %93 = vsyncpa [#allocation4], 1
    %94 = vsyncpa [#allocation5], 1

</llo_original>
